<compile_context>
chip_gen: v7x
topology: tpu7x:2x2x1
jax: 0.10.0
libtpu: 0.0.40
codegen_flags: <defaults>
</compile_context>

<pallas_src>
import jax
import jax.numpy as jnp
from jax.experimental import pallas as pl
from jax.experimental.pallas import tpu as pltpu


def location_attention_kernel(mask_ref, w_ref, x_ref, o_ref):
    # mask_ref: (S, S)      strict-lower-triangular f32, shared across the grid
    # w_ref:    (1, H+1)    lane-dense row = [linear weight | bias]
    # x_ref:    (Bt, S, H+1) = [x | ones] for this batch tile
    # o_ref:    (Bt, S, H)
    x = x_ref[...]
    w = w_ref[...]
    mask = mask_ref[...]

    bt, s, hp = x.shape
    h = o_ref.shape[-1]

    # logits[b, t] = <x[b, t, :H], weight> + bias  (the ones column carries the bias).
    # VPU multiply + lane reduce -> keeps the MXU free for the real (S,S)x(S,H+1) matmul.
    logits = jnp.sum(x * w[None, :, :], axis=-1, keepdims=True)      # (Bt, S, 1)
    attn = jnp.exp(logits)                                           # (Bt, S, 1)

    # ax[..., :H] = attn * x ; ax[..., H] = attn (ones column).
    ax = attn * x                                                    # (Bt, S, H+1)

    # One batched MXU matmul produces both the weighted numerator (lanes [0:H])
    # and the prefix-sum denominator (lane H) -- no degenerate N=1 matmul.
    mask_b = jnp.broadcast_to(mask[None, :, :], (bt, s, s))
    res = jnp.einsum("bts,bsh->bth", mask_b, ax,
                     preferred_element_type=jnp.float32)             # (Bt, S, H+1)

    num = res[..., :h]                                               # (Bt, S, H)
    den = res[..., h:h + 1] + 1e-9                                   # (Bt, S, 1)

    # One reciprocal per row, then a cheap VPU multiply (instead of S*H divides).
    # Exact (approx=False) because den can be as small as 1e-9.
    inv = pl.reciprocal(den, approx=False)
    o_ref[...] = num * inv


def _pick_batch_tile(B, S, H):
    """Largest batch tile whose per-step working set fits a conservative VMEM budget."""
    hp = H + 1
    # per-batch-element f32 bytes: double-buffered in/out tiles + ax/res intermediates
    # + the per-batch broadcast mask slice.
    per_b = 4 * (2 * S * hp + 2 * S * H + 2 * S * hp + S * S)
    budget = 6 * 1024 * 1024  # safe under the default scoped VMEM on v5e/v6e/v7x
    bt = max(1, budget // max(per_b, 1))
    return int(min(B, bt, 64))


def location_attention(x, w, b):
    """x: (B, S, H) f32, w: (H, 1) f32 (PyTorch weight.T), b: (1, 1) f32 -> (B, S, H) f32."""
    B, S, H = x.shape
    x = x.astype(jnp.float32)
    hp = H + 1

    # Augment x with a ones column: it carries the bias through the logit reduce and
    # carries `attn` through the mask matmul (giving the denominator for free).
    x_aug = jnp.concatenate([x, jnp.ones((B, S, 1), jnp.float32)], axis=-1)   # (B, S, H+1)
    w_aug = jnp.concatenate(
        [w.reshape(1, H).astype(jnp.float32), b.reshape(1, 1).astype(jnp.float32)],
        axis=-1)                                                              # (1, H+1)

    # Strict-lower-triangular flag == torch.triu(ones, diagonal=1).T, built once here.
    mask = jnp.tril(jnp.ones((S, S), jnp.float32), k=-1)

    bt = _pick_batch_tile(B, S, H)
    grid = (pl.cdiv(B, bt),)

    return pl.pallas_call(
        location_attention_kernel,
        out_shape=jax.ShapeDtypeStruct((B, S, H), jnp.float32),
        grid=grid,
        in_specs=[
            pl.BlockSpec((S, S), lambda i: (0, 0)),          # shared mask (hoisted)
            pl.BlockSpec((1, hp), lambda i: (0, 0)),         # shared [weight | bias] row
            pl.BlockSpec((bt, S, hp), lambda i: (i, 0, 0)),  # batch tile of augmented x
        ],
        out_specs=pl.BlockSpec((bt, S, H), lambda i: (i, 0, 0)),
        compiler_params=pltpu.CompilerParams(
            dimension_semantics=("parallel",)),              # shards across v7x's 2 TCs
    )(mask, w_aug, x_aug)


def location_attention_ref(x, w, b):
    """Pure-JAX reference mirroring the PyTorch module line-by-line."""
    B, S, H = x.shape
    attn = jnp.exp(jnp.einsum("bsh,ho->bs", x, w) + b[0, 0])      # (B, S)
    flag = jnp.tril(jnp.ones((S, S), jnp.float32), k=-1)          # (S, S)
    each = attn[:, None, :] * flag[None, :, :]                    # (B, S, S)
    acc = jnp.sum(each, axis=-1, keepdims=True) + 1e-9            # (B, S, 1)
    wgt = each / acc                                              # (B, S, S)
    return jnp.einsum("bts,bsh->bth", wgt, x)                     # (B, S, H)


if __name__ == "__main__":
    B, S, H = 2, 8, 32
    key = jax.random.PRNGKey(0)
    kx, kw, kb = jax.random.split(key, 3)

    x = jax.random.normal(kx, (B, S, H), dtype=jnp.float32)
    # Deterministic "Linear(hidden_size, 1)" params (weight.T and bias).
    w = jax.random.normal(kw, (H, 1), dtype=jnp.float32) * 0.1
    b = jax.random.normal(kb, (1, 1), dtype=jnp.float32) * 0.1

    out = jax.block_until_ready(location_attention(x, w, b))

    ref = location_attention_ref(x, w, b)
    max_err = float(jnp.max(jnp.abs(out - ref)))
    assert out.shape == (B, S, H)
    assert max_err < 1e-4, f"mismatch vs reference: {max_err}"

    print("KERNEL_OK")
</pallas_src>

<mosaic_0001>
module attributes {stable_mosaic.version = 11 : i64} {
  func.func @location_attention_kernel(%arg0: i32, %arg1: memref<8x8xf32, #tpu.memory_space<vmem>>, %arg2: memref<1x33xf32, #tpu.memory_space<vmem>>, %arg3: memref<2x8x33xf32, #tpu.memory_space<vmem>>, %arg4: memref<2x8x32xf32, #tpu.memory_space<vmem>>) attributes {dimension_semantics = [#tpu.dimension_semantics<parallel>], iteration_bounds = array<i64: 1>, scalar_prefetch = 0 : i64, scratch_operands = 0 : i64, tpu.core_type = #tpu.core_type<tc>, window_params = [{pipeline_mode = #tpu.pipeline_mode<synchronous>, transform_indices = @transform_0, window_bounds = array<i64: 8, 8>}, {pipeline_mode = #tpu.pipeline_mode<synchronous>, transform_indices = @transform_1, window_bounds = array<i64: 1, 33>}, {transform_indices = @transform_2, window_bounds = array<i64: 2, 8, 33>}, {transform_indices = @transform_3, window_bounds = array<i64: 2, 8, 32>}]} {
    %c0 = arith.constant 0 : index
    %c0_0 = arith.constant 0 : index
    %c0_1 = arith.constant 0 : index
    %0 = vector.load %arg3[%c0, %c0_0, %c0_1] : memref<2x8x33xf32, #tpu.memory_space<vmem>>, vector<2x8x33xf32>
    %c0_2 = arith.constant 0 : index
    %c0_3 = arith.constant 0 : index
    %1 = vector.load %arg2[%c0_2, %c0_3] : memref<1x33xf32, #tpu.memory_space<vmem>>, vector<1x33xf32>
    %c0_4 = arith.constant 0 : index
    %c0_5 = arith.constant 0 : index
    %2 = vector.load %arg1[%c0_4, %c0_5] : memref<8x8xf32, #tpu.memory_space<vmem>>, vector<8x8xf32>
    %3 = vector.shape_cast %1 : vector<1x33xf32> to vector<1x1x33xf32>
    %4 = vector.broadcast %3 : vector<1x1x33xf32> to vector<2x8x33xf32>
    %5 = arith.mulf %0, %4 : vector<2x8x33xf32>
    %cst = arith.constant dense<0.000000e+00> : vector<2x8xf32>
    %6 = vector.multi_reduction <add>, %5, %cst [2] : vector<2x8x33xf32> to vector<2x8xf32>
    %7 = vector.shape_cast %6 : vector<2x8xf32> to vector<2x8x1xf32>
    %8 = math.exp %7 : vector<2x8x1xf32>
    %9 = vector.broadcast %8 : vector<2x8x1xf32> to vector<2x8x33xf32>
    %10 = arith.mulf %9, %0 : vector<2x8x33xf32>
    %11 = vector.shape_cast %2 : vector<8x8xf32> to vector<1x8x8xf32>
    %12 = vector.shape_cast %11 : vector<1x8x8xf32> to vector<1x8x8xf32>
    %13 = vector.broadcast %12 : vector<1x8x8xf32> to vector<2x8x8xf32>
    "tpu.trace_start"() <{level = 10 : i32, message = "bts,bsh->bth"}> : () -> ()
    %cst_6 = arith.constant dense<0.000000e+00> : vector<2x8x33xf32>
    %14 = tpu.matmul %13, %10, %cst_6 {dimension_numbers = #tpu.dot_dimension_numbers<[2], [1], [1], [2], [0, 0, 0, 1, 1, 2], [0], [0]>} : vector<2x8x8xf32>, vector<2x8x33xf32>, vector<2x8x33xf32> -> vector<2x8x33xf32>
    "tpu.trace_stop"() : () -> ()
    %15 = vector.extract_strided_slice %14 {offsets = [0, 0, 0], sizes = [2, 8, 32], strides = [1, 1, 1]} : vector<2x8x33xf32> to vector<2x8x32xf32>
    %16 = vector.extract_strided_slice %14 {offsets = [0, 0, 32], sizes = [2, 8, 1], strides = [1, 1, 1]} : vector<2x8x33xf32> to vector<2x8x1xf32>
    %cst_7 = arith.constant 9.99999971E-10 : f32
    %17 = vector.broadcast %cst_7 : f32 to vector<2x8x1xf32>
    %18 = arith.addf %16, %17 : vector<2x8x1xf32>
    %19 = tpu.reciprocal %18 : vector<2x8x1xf32> -> vector<2x8x1xf32>
    %20 = vector.broadcast %19 : vector<2x8x1xf32> to vector<2x8x32xf32>
    %21 = arith.mulf %15, %20 : vector<2x8x32xf32>
    %c0_8 = arith.constant 0 : index
    %c0_9 = arith.constant 0 : index
    %c0_10 = arith.constant 0 : index
    %22 = vector.load %arg4[%c0_8, %c0_9, %c0_10] : memref<2x8x32xf32, #tpu.memory_space<vmem>>, vector<2x8x32xf32>
    tpu.vector_store %arg4[%c0_8, %c0_9, %c0_10], %21 {strides = array<i32>} : memref<2x8x32xf32, #tpu.memory_space<vmem>>, vector<2x8x32xf32>,
    return
  }
  func.func @transform_0(%arg0: i32) -> (i32, i32) {
    %c0_i32 = arith.constant 0 : i32
    %c0_i32_0 = arith.constant 0 : i32
    %c0_i32_1 = arith.constant 0 : i32
    return %c0_i32, %c0_i32_0 : i32, i32
  }
  func.func @transform_1(%arg0: i32) -> (i32, i32) {
    %c0_i32 = arith.constant 0 : i32
    %c0_i32_0 = arith.constant 0 : i32
    %c0_i32_1 = arith.constant 0 : i32
    return %c0_i32, %c0_i32_0 : i32, i32
  }
  func.func @transform_2(%arg0: i32) -> (i32, i32, i32) {
    %c0_i32 = arith.constant 0 : i32
    %c0_i32_0 = arith.constant 0 : i32
    %c0_i32_1 = arith.constant 0 : i32
    return %arg0, %c0_i32, %c0_i32_0 : i32, i32, i32
  }
  func.func @transform_3(%arg0: i32) -> (i32, i32, i32) {
    %c0_i32 = arith.constant 0 : i32
    %c0_i32_0 = arith.constant 0 : i32
    %c0_i32_1 = arith.constant 0 : i32
    return %arg0, %c0_i32, %c0_i32_0 : i32, i32, i32
  }
}

</mosaic_0001>

<llo_original>
// kernel: tpu_custom_call.1
$region0: #{tpu_custom_call.1}
  #allocation0 [shape = 'u32[]', space=smem, size = 0x4, offset = 0x4, fixed_abs, tag = 'smem constant byte address 0x4 - core index']
  #allocation1 [shape = 'u32[144,128]{1,0:T(1,128)}', space=vmem, size = 0x12000, scoped, tag = 'internal scratch']
  %s0 = inlined_call_operand.hbm [shape: f32[8,8], index: 0, kind: input, shape index: {}]
  %s1 = inlined_call_operand.vmem [shape: f32[1,33], index: 1, kind: input, shape index: {}]
  %s2 = inlined_call_operand.hbm [shape: f32[2,8,33], index: 2, kind: input, shape index: {}]
  %s3 = inlined_call_operand.hbm [shape: f32[2,8,32], index: 3, kind: output, shape index: {}]
  %s4 = sld [smem:[#allocation0]]
  $region30: #{tpu_custom_call.1} parent=0
    _
  %s6 = ssub.s32 1, %s4
  %s7 = scalar_select 0, %s6, %s4
  $region1: #{tpu_custom_call.1} parent=0
    #allocation2 [shape = 'u8[4096]{0}', space=vmem, size = 0x1000, scoped, tag = 'input window, operand 0, single buffered']
    #allocation3 [shape = 's32[1]{0}', space=sflag, size = 0x4, scoped, tag = 'scoped memory for tpu_custom_call.1']
    #allocation4 [shape = 's32[1]{0}', space=sflag, size = 0x4, scoped, tag = 'scoped memory for tpu_custom_call.1']
    #allocation5 [shape = 'u8[8192]{0}', space=vmem, size = 0x2000, scoped, tag = 'input window, operand 2, single buffered']
    #allocation6 [shape = 's32[1]{0}', space=sflag, size = 0x4, scoped, tag = 'scoped memory for tpu_custom_call.1']
    #allocation7 [shape = 'u8[8192]{0}', space=vmem, size = 0x2000, scoped, tag = 'output window, operand 0, single buffered']
    %8 = vsyncpa [#allocation3], 0
    %9 = vsyncpa [#allocation6], 0
    %10 = vsyncpa [#allocation4], 0
    // Predicated region
    $region2: #{tpu_custom_call.1} parent=1 // pred_check
      _
    $region3: #{tpu_custom_call.1} parent=1 // pred_check_branch
      %12 = sbr.rel (0) target = $region5
    $region4: #{tpu_custom_call.1} parent=1 // pred_region
      %s14 = ssub.s32 128, 128
      %15 = vsyncadd [#allocation3], %s14
      %s17 = sshll.u32 [#allocation2], 4
      %s18 = int_to_ptr.vmem [resolvable:$true] %s17
      %20 = dma.hbm_to_vmem [thread:$0]  %s0, 128, %s18, [#allocation3]
    $region5: #{tpu_custom_call.1} parent=1 // pred_fallthru
      _
    // Predicated region
    $region6: #{tpu_custom_call.1} parent=1 // pred_check
      _
    $region7: #{tpu_custom_call.1} parent=1 // pred_check_branch
      %22 = sbr.rel (0) target = $region9
    $region8: #{tpu_custom_call.1} parent=1 // pred_region
      _
    $region9: #{tpu_custom_call.1} parent=1 // pred_fallthru
      _
    // Predicated region
    $region10: #{tpu_custom_call.1} parent=1 // pred_check
      _
    $region11: #{tpu_custom_call.1} parent=1 // pred_check_branch
      %24 = sbr.rel (0) target = $region13
    $region12: #{tpu_custom_call.1} parent=1 // pred_region
      %s26 = ssub.s32 256, 256
      %27 = vsyncadd [#allocation6], %s26
      %s28 = sshll.u32 [#allocation5], 4
      %s29 = int_to_ptr.vmem [resolvable:$true] %s28
      %34 = dma.hbm_to_vmem [thread:$0]  %s2, 256, %s29, [#allocation6], 128, 128, 8
    $region13: #{tpu_custom_call.1} parent=1 // pred_fallthru
      _
    // Predicated region
    $region14: #{tpu_custom_call.1} parent=1 // pred_check
      _
    $region15: #{tpu_custom_call.1} parent=1 // pred_check_branch
      %36 = sbr.rel (0) target = $region17
    $region16: #{tpu_custom_call.1} parent=1 // pred_region
      %37 = dma.done [#allocation3], 128
    $region17: #{tpu_custom_call.1} parent=1 // pred_fallthru
      _
    // Predicated region
    $region18: #{tpu_custom_call.1} parent=1 // pred_check
      _
    $region19: #{tpu_custom_call.1} parent=1 // pred_check_branch
      %39 = sbr.rel (0) target = $region21
    $region20: #{tpu_custom_call.1} parent=1 // pred_region
      %40 = dma.done [#allocation6], 256
    $region21: #{tpu_custom_call.1} parent=1 // pred_fallthru
      _
    %v41 = vld [vmem:[#allocation5] sm:$0xff]
    %v42 = vld [vmem:[#allocation5 + $0x8] sm:$0xff]
    %v43 = vld [vmem:[%s1] sm:$0x1]
    %v44 = vld [vmem:[#allocation2] sm:$0xff]
    %v46 = vlaneseq
    %v47 = vshrl.u32 %v46, 7
    %v48 = vsub.s32 0, %v47
    %v49 = vrot.slane %v43, %v48
    %v51 = vmul.f32 %v41, %v49
    %v52 = vmul.f32 %v42, %v49
    %vm53 = vcmask 269312
    %v54 = vsel %vm53, %v51, 0.0
    %55 = vadd.xlane.f32.xlu0 %v54
    %v56 = vpop.xlane.xlu0 %55
    %v57 = vsel %vm53, %v52, 0.0
    %58 = vadd.xlane.f32.xlu0 %v57
    %v59 = vpop.xlane.xlu0 %58
    %v60 = vmul.f32 %v56, 1.442695
    %v61 = vpow.pop %v60
    %v62 = vmul.f32 %v59, 1.442695
    %v63 = vpow.pop %v62
    %v64 = vmul.f32 %v61, %v41
    %v65 = vmul.f32 %v63, %v42
    %vm66 = vcmask 64512
    %v68 = vsel %vm66, %v44, 0
    %70 = vmatprep.subr.mxu0 0.0
    %71 = vmatpush1.msra.mxu0 %v64
    %72 = vmatprep.subr.mxu0 0.0
    %73 = vmatpush1.msra.mxu0 0.0
    %74 = vmatprep.subr.mxu0 0.0
    %75 = vmatpush1.msra.mxu0 0.0
    %76 = vmatprep.subr.mxu0 0.0
    %77 = vmatpush1.msra.mxu0 0.0
    %78 = vmatprep.subr.mxu0 0.0
    %79 = vmatpush1.msra.mxu0 0.0
    %80 = vmatprep.subr.mxu0 0.0
    %81 = vmatpush1.msra.mxu0 0.0
    %82 = vmatprep.subr.mxu0 0.0
    %83 = vmatpush1.msra.mxu0 0.0
    %84 = vmatprep.subr.mxu0 0.0
    %85 = vmatpush1.msra.mxu0 0.0
    %86 = vmatprep.subr.mxu0 0.0
    %87 = vmatpush1.msra.mxu0 0.0
    %88 = vmatprep.subr.mxu0 0.0
    %89 = vmatpush1.msra.mxu0 0.0
    %90 = vmatprep.subr.mxu0 0.0
    %91 = vmatpush1.msra.mxu0 0.0
    %92 = vmatprep.subr.mxu0 0.0
    %93 = vmatpush1.msra.mxu0 0.0
    %94 = vmatprep.subr.mxu0 0.0
    %95 = vmatpush1.msra.mxu0 0.0
    %96 = vmatprep.subr.mxu0 0.0
    %97 = vmatpush1.msra.mxu0 0.0
    %98 = vmatprep.subr.mxu0 0.0
    %99 = vmatpush1.msra.mxu0 0.0
    %100 = vmatprep.subr.mxu0 0.0
    %101 = vmatpush1.msra.mxu0 0.0
    %102 = vmatprep.subr.mxu0 0.0
    %103 = vmatpush1.msra.mxu0 0.0
    %104 = vmatprep.subr.mxu0 0.0
    %105 = vmatpush1.msra.mxu0 0.0
    %106 = vmatprep.subr.mxu0 0.0
    %107 = vmatpush1.msra.mxu0 0.0
    %108 = vmatprep.subr.mxu0 0.0
    %109 = vmatpush1.msra.mxu0 0.0
    %110 = vmatprep.subr.mxu0 0.0
    %111 = vmatpush1.msra.mxu0 0.0
    %112 = vmatprep.subr.mxu0 0.0
    %113 = vmatpush1.msra.mxu0 0.0
    %114 = vmatprep.subr.mxu0 0.0
    %115 = vmatpush1.msra.mxu0 0.0
    %116 = vmatprep.subr.mxu0 0.0
    %117 = vmatpush1.msra.mxu0 0.0
    %118 = vmatprep.subr.mxu0 0.0
    %119 = vmatpush1.msra.mxu0 0.0
    %120 = vmatprep.subr.mxu0 0.0
    %121 = vmatpush1.msra.mxu0 0.0
    %122 = vmatprep.subr.mxu0 0.0
    %123 = vmatpush1.msra.mxu0 0.0
    %124 = vmatprep.subr.mxu0 0.0
    %125 = vmatpush1.msra.mxu0 0.0
    %126 = vmatprep.subr.mxu0 0.0
    %127 = vmatpush1.msra.mxu0 0.0
    %128 = vmatprep.subr.mxu0 0.0
    %129 = vmatpush1.msra.mxu0 0.0
    %130 = vmatprep.subr.mxu0 0.0
    %131 = vmatpush1.msra.mxu0 0.0
    %132 = vmatprep.subr.mxu0 0.0
    %133 = vmatpush1.msra.mxu0 0.0
    %134 = vmatprep.mubr.f32.mxu0 0.0
    %135 = vmatmul.mubr.f32.gmra.mrb[0].mxu0 %v68
    %v136 = vpop.f32.mrb[0].mxu0
    %v137 = vadd.f32 0.0, %v136
    %v138 = vpop.f32.mrb[0].mxu0
    %139 = vdwg.mxu0
    %140 = vmatprep.subr.mxu0 0.0
    %141 = vmatpush1.msra.mxu0 %v65
    %142 = vmatprep.subr.mxu0 0.0
    %143 = vmatpush1.msra.mxu0 0.0
    %144 = vmatprep.subr.mxu0 0.0
    %145 = vmatpush1.msra.mxu0 0.0
    %146 = vmatprep.subr.mxu0 0.0
    %147 = vmatpush1.msra.mxu0 0.0
    %148 = vmatprep.subr.mxu0 0.0
    %149 = vmatpush1.msra.mxu0 0.0
    %150 = vmatprep.subr.mxu0 0.0
    %151 = vmatpush1.msra.mxu0 0.0
    %152 = vmatprep.subr.mxu0 0.0
    %153 = vmatpush1.msra.mxu0 0.0
    %154 = vmatprep.subr.mxu0 0.0
    %155 = vmatpush1.msra.mxu0 0.0
    %156 = vmatprep.subr.mxu0 0.0
    %157 = vmatpush1.msra.mxu0 0.0
    %158 = vmatprep.subr.mxu0 0.0
    %159 = vmatpush1.msra.mxu0 0.0
    %160 = vmatprep.subr.mxu0 0.0
    %161 = vmatpush1.msra.mxu0 0.0
    %162 = vmatprep.subr.mxu0 0.0
    %163 = vmatpush1.msra.mxu0 0.0
    %164 = vmatprep.subr.mxu0 0.0
    %165 = vmatpush1.msra.mxu0 0.0
    %166 = vmatprep.subr.mxu0 0.0
    %167 = vmatpush1.msra.mxu0 0.0
    %168 = vmatprep.subr.mxu0 0.0
    %169 = vmatpush1.msra.mxu0 0.0
    %170 = vmatprep.subr.mxu0 0.0
    %171 = vmatpush1.msra.mxu0 0.0
    %172 = vmatprep.subr.mxu0 0.0
    %173 = vmatpush1.msra.mxu0 0.0
    %174 = vmatprep.subr.mxu0 0.0
    %175 = vmatpush1.msra.mxu0 0.0
    %176 = vmatprep.subr.mxu0 0.0
    %177 = vmatpush1.msra.mxu0 0.0
    %178 = vmatprep.subr.mxu0 0.0
    %179 = vmatpush1.msra.mxu0 0.0
    %180 = vmatprep.subr.mxu0 0.0
    %181 = vmatpush1.msra.mxu0 0.0
    %182 = vmatprep.subr.mxu0 0.0
    %183 = vmatpush1.msra.mxu0 0.0
    %184 = vmatprep.subr.mxu0 0.0
    %185 = vmatpush1.msra.mxu0 0.0
    %186 = vmatprep.subr.mxu0 0.0
    %187 = vmatpush1.msra.mxu0 0.0
    %188 = vmatprep.subr.mxu0 0.0
    %189 = vmatpush1.msra.mxu0 0.0
    %190 = vmatprep.subr.mxu0 0.0
    %191 = vmatpush1.msra.mxu0 0.0
    %192 = vmatprep.subr.mxu0 0.0
    %193 = vmatpush1.msra.mxu0 0.0
    %194 = vmatprep.subr.mxu0 0.0
    %195 = vmatpush1.msra.mxu0 0.0
    %196 = vmatprep.subr.mxu0 0.0
    %197 = vmatpush1.msra.mxu0 0.0
    %198 = vmatprep.subr.mxu0 0.0
    %199 = vmatpush1.msra.mxu0 0.0
    %200 = vmatprep.subr.mxu0 0.0
    %201 = vmatpush1.msra.mxu0 0.0
    %202 = vmatprep.subr.mxu0 0.0
    %203 = vmatpush1.msra.mxu0 0.0
    %204 = vmatprep.mubr.f32.mxu0 0.0
    %205 = vmatmul.mubr.f32.gmra.mrb[0].mxu0 %v68
    %v206 = vpop.f32.mrb[0].mxu0
    %v207 = vadd.f32 0.0, %v206
    %v208 = vpop.f32.mrb[0].mxu0
    %209 = vdwg.mxu0
    %v210 = vadd.f32 %v137, 1e-09
    %v211 = vadd.f32 %v207, 1e-09
    %v212 = vrcp.pop %v210
    %v213 = vrcp.pop %v211
    %215 = vset.pattern.permute.xlu0 32
    %216 = vperm.xlu0 %215, %v212
    %v217 = vpop.permute.xlu0 %216
    %220 = vset.pattern.permute.xlu0 32
    %221 = vperm.xlu0 %220, %v213
    %v222 = vpop.permute.xlu0 %221
    %v224 = vmul.f32 %v137, %v217
    %v225 = vmul.f32 %v207, %v222
    %vm226 = vcmask 261120
    %227 = vst.msk [vmem:[#allocation7] sm:$0xff] %vm226, %v224
    %228 = vst.msk [vmem:[#allocation7 + $0x8] sm:$0xff] %vm226, %v225
    // Predicated region
    $region22: #{tpu_custom_call.1} parent=1 // pred_check
      _
    $region23: #{tpu_custom_call.1} parent=1 // pred_check_branch
      %230 = sbr.rel (0) target = $region25
    $region24: #{tpu_custom_call.1} parent=1 // pred_region
      %s232 = ssub.s32 256, 256
      %233 = vsyncadd [#allocation4], %s232
      %s234 = sshll.u32 [#allocation7], 4
      %s235 = int_to_ptr.vmem [resolvable:$true] %s234
      %240 = dma.vmem_to_hbm [thread:$0]  %s235, 256, %s3, [#allocation4], 128, 128, 8
    $region25: #{tpu_custom_call.1} parent=1 // pred_fallthru
      _
    // Predicated region
    $region26: #{tpu_custom_call.1} parent=1 // pred_check
      _
    $region27: #{tpu_custom_call.1} parent=1 // pred_check_branch
      %242 = sbr.rel (0) target = $region29
    $region28: #{tpu_custom_call.1} parent=1 // pred_region
      %243 = dma.done [#allocation4], 256
    $region29: #{tpu_custom_call.1} parent=1 // pred_fallthru
      _
    %244 = vsyncpa [#allocation3], 1
    %245 = vsyncpa [#allocation6], 1
    %246 = vsyncpa [#allocation4], 1

</llo_original>
